<compile_context>
chip_gen: v7x
topology: tpu7x:2x2x1
jax: 0.10.0
libtpu: 0.0.40
codegen_flags: <defaults>
</compile_context>

<pallas_src>
import functools

import jax
import jax.numpy as jnp
from jax.experimental import pallas as pl
from jax.experimental.pallas import tpu as pltpu


def _round_up(x, m):
    return ((x + m - 1) // m) * m


def _actor_kernel(x_ref, w1_ref, b1_ref, w2_ref, b2_ref, w3_ref, b3_ref, o_ref):
    # Fused 3-layer MLP on one batch tile. Weights arrive as bf16 (halved DMA bytes,
    # native MXU rate); accumulation / elementwise math stays f32 (v5e has no bf16 VPU).
    x = x_ref[...].astype(jnp.bfloat16)
    h1 = jnp.dot(x, w1_ref[...], preferred_element_type=jnp.float32) + b1_ref[...]
    h1 = jnp.maximum(h1, 0.0)                                   # ReLU (f32)
    h2 = jnp.dot(h1.astype(jnp.bfloat16), w2_ref[...],
                 preferred_element_type=jnp.float32) + b2_ref[...]
    h2 = jnp.maximum(h2, 0.0)                                   # ReLU (f32)
    h3 = jnp.dot(h2.astype(jnp.bfloat16), w3_ref[...],
                 preferred_element_type=jnp.float32) + b3_ref[...]
    o_ref[...] = jnp.tanh(h3).astype(o_ref.dtype)               # tanh (f32)


@functools.partial(jax.jit, static_argnames=("tm",))
def actor_forward(state, w1, b1, w2, b2, w3, b3, *, tm=256):
    """state: (B, state_size) f32 -> (B, action_size) f32."""
    B, state_size = state.shape
    l1 = w1.shape[1]
    l2 = w2.shape[1]
    action_size = w3.shape[1]

    # Batch tile: TM rows per grid step (256 fills the v6e/v7x MXU M-dim; min sublane 8).
    tm_eff = min(tm, _round_up(B, 8))
    padded_B = _round_up(B, tm_eff)
    if padded_B != B:
        state = jnp.pad(state, ((0, padded_B - B), (0, 0)))

    # bf16 weights for the MXU; biases stay f32.
    w1b = w1.astype(jnp.bfloat16)
    w2b = w2.astype(jnp.bfloat16)
    w3b = w3.astype(jnp.bfloat16)

    grid = (padded_B // tm_eff,)
    out = pl.pallas_call(
        _actor_kernel,
        out_shape=jax.ShapeDtypeStruct((padded_B, action_size), jnp.float32),
        grid=grid,
        in_specs=[
            pl.BlockSpec((tm_eff, state_size), lambda i: (i, 0)),   # streamed per tile
            pl.BlockSpec((state_size, l1), lambda i: (0, 0)),       # weights: resident
            pl.BlockSpec((1, l1), lambda i: (0, 0)),
            pl.BlockSpec((l1, l2), lambda i: (0, 0)),
            pl.BlockSpec((1, l2), lambda i: (0, 0)),
            pl.BlockSpec((l2, action_size), lambda i: (0, 0)),
            pl.BlockSpec((1, action_size), lambda i: (0, 0)),
        ],
        out_specs=pl.BlockSpec((tm_eff, action_size), lambda i: (i, 0)),
        compiler_params=pltpu.CompilerParams(
            dimension_semantics=("parallel",),   # v7x: shard batch across 2 TCs
        ),
    )(state, w1b, b1, w2b, b2, w3b, b3)
    # TODO(synk): if store-bound at very large B, pad action_size to 128 (lane-dense
    # stores) inside the kernel and slice here instead.
    return out[:B]


def init_actor_params(key, state_size, action_size, layer1_size=256, layer2_size=128):
    """Deterministic init mimicking nn.Linear's U(-1/sqrt(fan_in), 1/sqrt(fan_in))."""
    def linear(k, fan_in, fan_out):
        kw, kb = jax.random.split(k)
        bound = 1.0 / jnp.sqrt(fan_in)
        w = jax.random.uniform(kw, (fan_in, fan_out), jnp.float32, -bound, bound)
        b = jax.random.uniform(kb, (1, fan_out), jnp.float32, -bound, bound)
        return w, b

    k1, k2, k3 = jax.random.split(key, 3)
    w1, b1 = linear(k1, state_size, layer1_size)
    w2, b2 = linear(k2, layer1_size, layer2_size)
    w3, b3 = linear(k3, layer2_size, action_size)
    return w1, b1, w2, b2, w3, b3


def _reference(state, w1, b1, w2, b2, w3, b3):
    # Same math as the kernel (bf16 MXU inputs, f32 accumulation) for a tight check.
    bf = jnp.bfloat16
    h1 = jnp.maximum(
        jnp.dot(state.astype(bf), w1.astype(bf), preferred_element_type=jnp.float32) + b1, 0.0)
    h2 = jnp.maximum(
        jnp.dot(h1.astype(bf), w2.astype(bf), preferred_element_type=jnp.float32) + b2, 0.0)
    h3 = jnp.dot(h2.astype(bf), w3.astype(bf), preferred_element_type=jnp.float32) + b3
    return jnp.tanh(h3)


if __name__ == "__main__":
    key = jax.random.PRNGKey(0)
    k_params, k_state_a, k_state_b = jax.random.split(key, 3)

    state_size = 32
    action_size = 8
    params = init_actor_params(k_params, state_size, action_size)
    w1, b1, w2, b2, w3, b3 = params

    # Small batch (single tile, grid=(1,)).
    batch_a = 8
    state_a = jax.random.normal(k_state_a, (batch_a, state_size), jnp.float32)
    out_a = actor_forward(state_a, *params)
    jax.block_until_ready(out_a)
    assert out_a.shape == (batch_a, action_size)
    ref_a = _reference(state_a, *params)
    assert jnp.allclose(out_a, ref_a, atol=1e-3, rtol=1e-3)

    # Ragged batch (exercises padding + multi-step grid: padded to 512, grid=(2,)).
    batch_b = 260
    state_b = jax.random.normal(k_state_b, (batch_b, state_size), jnp.float32)
    out_b = actor_forward(state_b, *params)
    jax.block_until_ready(out_b)
    assert out_b.shape == (batch_b, action_size)
    ref_b = _reference(state_b, *params)
    assert jnp.allclose(out_b, ref_b, atol=1e-3, rtol=1e-3)

    # Loose sanity check vs a pure-f32 reference (bf16 weights introduce <~1% error).
    ref_f32 = jnp.tanh(
        jnp.maximum(jnp.maximum(state_a @ w1 + b1, 0.0) @ w2 + b2, 0.0) @ w3 + b3
    )
    assert jnp.max(jnp.abs(out_a - ref_f32)) < 5e-2

    print("KERNEL_OK")
</pallas_src>

<mosaic_0001>
module attributes {stable_mosaic.version = 11 : i64} {
  func.func @_actor_kernel(%arg0: i32, %arg1: memref<8x32xf32, #tpu.memory_space<vmem>>, %arg2: memref<32x256xbf16, #tpu.memory_space<vmem>>, %arg3: memref<1x256xf32, #tpu.memory_space<vmem>>, %arg4: memref<256x128xbf16, #tpu.memory_space<vmem>>, %arg5: memref<1x128xf32, #tpu.memory_space<vmem>>, %arg6: memref<128x8xbf16, #tpu.memory_space<vmem>>, %arg7: memref<1x8xf32, #tpu.memory_space<vmem>>, %arg8: memref<8x8xf32, #tpu.memory_space<vmem>>) attributes {dimension_semantics = [#tpu.dimension_semantics<parallel>], iteration_bounds = array<i64: 1>, scalar_prefetch = 0 : i64, scratch_operands = 0 : i64, tpu.core_type = #tpu.core_type<tc>, window_params = [{transform_indices = @transform_0, window_bounds = array<i64: 8, 32>}, {pipeline_mode = #tpu.pipeline_mode<synchronous>, transform_indices = @transform_1, window_bounds = array<i64: 32, 256>}, {pipeline_mode = #tpu.pipeline_mode<synchronous>, transform_indices = @transform_2, window_bounds = array<i64: 1, 256>}, {pipeline_mode = #tpu.pipeline_mode<synchronous>, transform_indices = @transform_3, window_bounds = array<i64: 256, 128>}, {pipeline_mode = #tpu.pipeline_mode<synchronous>, transform_indices = @transform_4, window_bounds = array<i64: 1, 128>}, {pipeline_mode = #tpu.pipeline_mode<synchronous>, transform_indices = @transform_5, window_bounds = array<i64: 128, 8>}, {pipeline_mode = #tpu.pipeline_mode<synchronous>, transform_indices = @transform_6, window_bounds = array<i64: 1, 8>}, {transform_indices = @transform_7, window_bounds = array<i64: 8, 8>}]} {
    %c0 = arith.constant 0 : index
    %c0_0 = arith.constant 0 : index
    %0 = vector.load %arg1[%c0, %c0_0] : memref<8x32xf32, #tpu.memory_space<vmem>>, vector<8x32xf32>
    %1 = arith.truncf %0 : vector<8x32xf32> to vector<8x32xbf16>
    %c0_1 = arith.constant 0 : index
    %c0_2 = arith.constant 0 : index
    %2 = vector.load %arg2[%c0_1, %c0_2] : memref<32x256xbf16, #tpu.memory_space<vmem>>, vector<32x256xbf16>
    %cst = arith.constant dense<0.000000e+00> : vector<8x256xf32>
    %3 = tpu.matmul %1, %2, %cst {dimension_numbers = #tpu.dot_dimension_numbers<[1], [0], [0], [1], [0, 0, 1, 1], [], []>} : vector<8x32xbf16>, vector<32x256xbf16>, vector<8x256xf32> -> vector<8x256xf32>
    %c0_3 = arith.constant 0 : index
    %c0_4 = arith.constant 0 : index
    %4 = vector.load %arg3[%c0_3, %c0_4] : memref<1x256xf32, #tpu.memory_space<vmem>>, vector<1x256xf32>
    %5 = vector.broadcast %4 : vector<1x256xf32> to vector<8x256xf32>
    %6 = arith.addf %3, %5 : vector<8x256xf32>
    %cst_5 = arith.constant 0.000000e+00 : f32
    %7 = vector.broadcast %cst_5 : f32 to vector<8x256xf32>
    %8 = arith.maximumf %6, %7 : vector<8x256xf32>
    %9 = arith.truncf %8 : vector<8x256xf32> to vector<8x256xbf16>
    %c0_6 = arith.constant 0 : index
    %c0_7 = arith.constant 0 : index
    %10 = vector.load %arg4[%c0_6, %c0_7] : memref<256x128xbf16, #tpu.memory_space<vmem>>, vector<256x128xbf16>
    %cst_8 = arith.constant dense<0.000000e+00> : vector<8x128xf32>
    %11 = tpu.matmul %9, %10, %cst_8 {dimension_numbers = #tpu.dot_dimension_numbers<[1], [0], [0], [1], [0, 0, 1, 1], [], []>} : vector<8x256xbf16>, vector<256x128xbf16>, vector<8x128xf32> -> vector<8x128xf32>
    %c0_9 = arith.constant 0 : index
    %c0_10 = arith.constant 0 : index
    %12 = vector.load %arg5[%c0_9, %c0_10] : memref<1x128xf32, #tpu.memory_space<vmem>>, vector<1x128xf32>
    %13 = vector.broadcast %12 : vector<1x128xf32> to vector<8x128xf32>
    %14 = arith.addf %11, %13 : vector<8x128xf32>
    %cst_11 = arith.constant 0.000000e+00 : f32
    %15 = vector.broadcast %cst_11 : f32 to vector<8x128xf32>
    %16 = arith.maximumf %14, %15 : vector<8x128xf32>
    %17 = arith.truncf %16 : vector<8x128xf32> to vector<8x128xbf16>
    %c0_12 = arith.constant 0 : index
    %c0_13 = arith.constant 0 : index
    %18 = vector.load %arg6[%c0_12, %c0_13] : memref<128x8xbf16, #tpu.memory_space<vmem>>, vector<128x8xbf16>
    %cst_14 = arith.constant dense<0.000000e+00> : vector<8x8xf32>
    %19 = tpu.matmul %17, %18, %cst_14 {dimension_numbers = #tpu.dot_dimension_numbers<[1], [0], [0], [1], [0, 0, 1, 1], [], []>} : vector<8x128xbf16>, vector<128x8xbf16>, vector<8x8xf32> -> vector<8x8xf32>
    %c0_15 = arith.constant 0 : index
    %c0_16 = arith.constant 0 : index
    %20 = vector.load %arg7[%c0_15, %c0_16] : memref<1x8xf32, #tpu.memory_space<vmem>>, vector<1x8xf32>
    %21 = vector.broadcast %20 : vector<1x8xf32> to vector<8x8xf32>
    %22 = arith.addf %19, %21 : vector<8x8xf32>
    %23 = math.tanh %22 : vector<8x8xf32>
    %c0_17 = arith.constant 0 : index
    %c0_18 = arith.constant 0 : index
    %24 = vector.load %arg8[%c0_17, %c0_18] : memref<8x8xf32, #tpu.memory_space<vmem>>, vector<8x8xf32>
    tpu.vector_store %arg8[%c0_17, %c0_18], %23 {strides = array<i32>} : memref<8x8xf32, #tpu.memory_space<vmem>>, vector<8x8xf32>,
    return
  }
  func.func @transform_0(%arg0: i32) -> (i32, i32) {
    %c0_i32 = arith.constant 0 : i32
    %c0_i32_0 = arith.constant 0 : i32
    return %arg0, %c0_i32 : i32, i32
  }
  func.func @transform_1(%arg0: i32) -> (i32, i32) {
    %c0_i32 = arith.constant 0 : i32
    %c0_i32_0 = arith.constant 0 : i32
    %c0_i32_1 = arith.constant 0 : i32
    return %c0_i32, %c0_i32_0 : i32, i32
  }
  func.func @transform_2(%arg0: i32) -> (i32, i32) {
    %c0_i32 = arith.constant 0 : i32
    %c0_i32_0 = arith.constant 0 : i32
    %c0_i32_1 = arith.constant 0 : i32
    return %c0_i32, %c0_i32_0 : i32, i32
  }
  func.func @transform_3(%arg0: i32) -> (i32, i32) {
    %c0_i32 = arith.constant 0 : i32
    %c0_i32_0 = arith.constant 0 : i32
    %c0_i32_1 = arith.constant 0 : i32
    return %c0_i32, %c0_i32_0 : i32, i32
  }
  func.func @transform_4(%arg0: i32) -> (i32, i32) {
    %c0_i32 = arith.constant 0 : i32
    %c0_i32_0 = arith.constant 0 : i32
    %c0_i32_1 = arith.constant 0 : i32
    return %c0_i32, %c0_i32_0 : i32, i32
  }
  func.func @transform_5(%arg0: i32) -> (i32, i32) {
    %c0_i32 = arith.constant 0 : i32
    %c0_i32_0 = arith.constant 0 : i32
    %c0_i32_1 = arith.constant 0 : i32
    return %c0_i32, %c0_i32_0 : i32, i32
  }
  func.func @transform_6(%arg0: i32) -> (i32, i32) {
    %c0_i32 = arith.constant 0 : i32
    %c0_i32_0 = arith.constant 0 : i32
    %c0_i32_1 = arith.constant 0 : i32
    return %c0_i32, %c0_i32_0 : i32, i32
  }
  func.func @transform_7(%arg0: i32) -> (i32, i32) {
    %c0_i32 = arith.constant 0 : i32
    %c0_i32_0 = arith.constant 0 : i32
    return %arg0, %c0_i32 : i32, i32
  }
}

</mosaic_0001>

<llo_original>
// kernel: actor_forward.1
$region0: #{actor_forward.1}
  #allocation0 [shape = 'u32[]', space=smem, size = 0x4, offset = 0x4, fixed_abs, tag = 'smem constant byte address 0x4 - core index']
  #allocation1 [shape = 'u32[144,128]{1,0:T(1,128)}', space=vmem, size = 0x12000, scoped, tag = 'internal scratch']
  %s0 = inlined_call_operand.vmem [shape: f32[8,32], index: 0, kind: input, shape index: {}]
  %s1 = inlined_call_operand.vmem [shape: bf16[32,256], index: 1, kind: input, shape index: {}]
  %s2 = inlined_call_operand.vmem [shape: f32[1,256], index: 2, kind: input, shape index: {}]
  %s3 = inlined_call_operand.vmem [shape: bf16[256,128], index: 3, kind: input, shape index: {}]
  %s4 = inlined_call_operand.vmem [shape: f32[1,128], index: 4, kind: input, shape index: {}]
  %s5 = inlined_call_operand.vmem [shape: bf16[128,8], index: 5, kind: input, shape index: {}]
  %s6 = inlined_call_operand.vmem [shape: f32[1,8], index: 6, kind: input, shape index: {}]
  %s7 = inlined_call_operand.hbm [shape: f32[8,8], index: 7, kind: output, shape index: {}]
  %s8 = sld [smem:[#allocation0]]
  $region38: #{actor_forward.1} parent=0
    _
  %s10 = ssub.s32 1, %s8
  %s11 = scalar_select 0, %s10, %s8
  $region1: #{actor_forward.1} parent=0
    #allocation2 [shape = 'u8[4096]{0}', space=vmem, size = 0x1000, scoped, tag = 'output window, operand 0, single buffered']
    #allocation3 [shape = 's32[1]{0}', space=sflag, size = 0x4, scoped, tag = 'scoped memory for actor_forward.1']
    %12 = vsyncpa [#allocation3], 0
    // Predicated region
    $region2: #{actor_forward.1} parent=1 // pred_check
      _
    $region3: #{actor_forward.1} parent=1 // pred_check_branch
      %14 = sbr.rel (0) target = $region5
    $region4: #{actor_forward.1} parent=1 // pred_region
      _
    $region5: #{actor_forward.1} parent=1 // pred_fallthru
      _
    // Predicated region
    $region6: #{actor_forward.1} parent=1 // pred_check
      _
    $region7: #{actor_forward.1} parent=1 // pred_check_branch
      %16 = sbr.rel (0) target = $region9
    $region8: #{actor_forward.1} parent=1 // pred_region
      _
    $region9: #{actor_forward.1} parent=1 // pred_fallthru
      _
    // Predicated region
    $region10: #{actor_forward.1} parent=1 // pred_check
      _
    $region11: #{actor_forward.1} parent=1 // pred_check_branch
      %18 = sbr.rel (0) target = $region13
    $region12: #{actor_forward.1} parent=1 // pred_region
      _
    $region13: #{actor_forward.1} parent=1 // pred_fallthru
      _
    // Predicated region
    $region14: #{actor_forward.1} parent=1 // pred_check
      _
    $region15: #{actor_forward.1} parent=1 // pred_check_branch
      %20 = sbr.rel (0) target = $region17
    $region16: #{actor_forward.1} parent=1 // pred_region
      _
    $region17: #{actor_forward.1} parent=1 // pred_fallthru
      _
    // Predicated region
    $region18: #{actor_forward.1} parent=1 // pred_check
      _
    $region19: #{actor_forward.1} parent=1 // pred_check_branch
      %22 = sbr.rel (0) target = $region21
    $region20: #{actor_forward.1} parent=1 // pred_region
      _
    $region21: #{actor_forward.1} parent=1 // pred_fallthru
      _
    // Predicated region
    $region22: #{actor_forward.1} parent=1 // pred_check
      _
    $region23: #{actor_forward.1} parent=1 // pred_check_branch
      %24 = sbr.rel (0) target = $region25
    $region24: #{actor_forward.1} parent=1 // pred_region
      _
    $region25: #{actor_forward.1} parent=1 // pred_fallthru
      _
    // Predicated region
    $region26: #{actor_forward.1} parent=1 // pred_check
      _
    $region27: #{actor_forward.1} parent=1 // pred_check_branch
      %26 = sbr.rel (0) target = $region29
    $region28: #{actor_forward.1} parent=1 // pred_region
      _
    $region29: #{actor_forward.1} parent=1 // pred_fallthru
      _
    %v28 = vld [vmem:[%s0] sm:$0xff]
    %v29 = vpack.c.bf16 %v28, %v28
    %v30 = vld [vmem:[%s1] sm:$0xff]
    %v31 = vld [vmem:[%s1 + $0x8] sm:$0xff]
    %v32 = vld [vmem:[%s1 + $0x10] sm:$0xff]
    %v33 = vld [vmem:[%s1 + $0x18] sm:$0xff]
    %v34 = vld [vmem:[%s2] sm:$0x3]
    %v36 = vlaneseq
    %v37 = vshrl.u32 %v36, 7
    %v38 = vsub.s32 0, %v37
    %v39 = vrot.slane %v34, %v38
    %v40 = vlaneseq
    %v41 = vshrl.u32 %v40, 7
    %v42 = vsub.s32 1, %v41
    %v43 = vrot.slane %v34, %v42
    %v50 = vunpack.c.l.b16 %v30
    %v51 = vunpack.c.h.b16 %v30
    %v52 = vunpack.c.l.b16 %v31
    %v53 = vunpack.c.h.b16 %v31
    %v54 = vunpack.c.l.b16 %v32
    %v55 = vunpack.c.h.b16 %v32
    %v56 = vunpack.c.l.b16 %v33
    %v57 = vunpack.c.h.b16 %v33
    %v58 = vpack.c.b16 %v52, %v50
    %v59 = vpack.c.b16 %v53, %v51
    %v60 = vpack.c.b16 %v56, %v54
    %v61 = vpack.c.b16 %v57, %v55
    %vm66 = vcmask 261120
    %v68 = vsel %vm66, %v29, 0
    %70 = vmatprep.subr.bf16.mxu0 %v59
    %71 = vmatpush1.bf16.msra.mxu0 %v58
    %72 = vmatprep.subr.bf16.mxu0 %v61
    %73 = vmatpush1.bf16.msra.mxu0 %v60
    %74 = vmatprep.subr.bf16.mxu0 0
    %75 = vmatpush1.bf16.msra.mxu0 0
    %76 = vmatprep.subr.bf16.mxu0 0
    %77 = vmatpush1.bf16.msra.mxu0 0
    %78 = vmatprep.subr.bf16.mxu0 0
    %79 = vmatpush1.bf16.msra.mxu0 0
    %80 = vmatprep.subr.bf16.mxu0 0
    %81 = vmatpush1.bf16.msra.mxu0 0
    %82 = vmatprep.subr.bf16.mxu0 0
    %83 = vmatpush1.bf16.msra.mxu0 0
    %84 = vmatprep.subr.bf16.mxu0 0
    %85 = vmatpush1.bf16.msra.mxu0 0
    %86 = vmatprep.subr.bf16.mxu0 0
    %87 = vmatpush1.bf16.msra.mxu0 0
    %88 = vmatprep.subr.bf16.mxu0 0
    %89 = vmatpush1.bf16.msra.mxu0 0
    %90 = vmatprep.subr.bf16.mxu0 0
    %91 = vmatpush1.bf16.msra.mxu0 0
    %92 = vmatprep.subr.bf16.mxu0 0
    %93 = vmatpush1.bf16.msra.mxu0 0
    %94 = vmatprep.subr.bf16.mxu0 0
    %95 = vmatpush1.bf16.msra.mxu0 0
    %96 = vmatprep.subr.bf16.mxu0 0
    %97 = vmatpush1.bf16.msra.mxu0 0
    %98 = vmatprep.subr.bf16.mxu0 0
    %99 = vmatpush1.bf16.msra.mxu0 0
    %100 = vmatprep.subr.bf16.mxu0 0
    %101 = vmatpush1.bf16.msra.mxu0 0
    %102 = vmatprep.mubr.bf16.mxu0 0
    %103 = vmatmul.mubr.bf16.gmra.mrb[0].mxu0 %v68
    %v104 = vpop.f32.mrb[0].mxu0
    %v105 = vadd.f32 %v39, %v104
    %v106 = vpop.f32.mrb[0].mxu0
    %v107 = vadd.f32 %v43, %v106
    %v108 = vpop.f32.mrb[0].mxu0
    %v109 = vpop.f32.mrb[0].mxu0
    %110 = vdwg.mxu0
    %v111 = vmax.f32 %v105, 0.0
    %v112 = vmax.f32 %v107, 0.0
    %v113 = vpack.c.bf16 %v111, %v111
    %v114 = vpack.c.bf16 %v112, %v112
    %v115 = vld [vmem:[%s3] sm:$0xf]
    %v116 = vld [vmem:[%s3 + $0x4] sm:$0xf]
    %v117 = vld [vmem:[%s3 + $0x8] sm:$0xf]
    %v118 = vld [vmem:[%s3 + $0xc] sm:$0xf]
    %v119 = vld [vmem:[%s3 + $0x10] sm:$0xf]
    %v120 = vld [vmem:[%s3 + $0x14] sm:$0xf]
    %v121 = vld [vmem:[%s3 + $0x18] sm:$0xf]
    %v122 = vld [vmem:[%s3 + $0x1c] sm:$0xf]
    %v123 = vld [vmem:[%s3 + $0x20] sm:$0xf]
    %v124 = vld [vmem:[%s3 + $0x24] sm:$0xf]
    %v125 = vld [vmem:[%s3 + $0x28] sm:$0xf]
    %v126 = vld [vmem:[%s3 + $0x2c] sm:$0xf]
    %v127 = vld [vmem:[%s3 + $0x30] sm:$0xf]
    %v128 = vld [vmem:[%s3 + $0x34] sm:$0xf]
    %v129 = vld [vmem:[%s3 + $0x38] sm:$0xf]
    %v130 = vld [vmem:[%s3 + $0x3c] sm:$0xf]
    %v131 = vld [vmem:[%s3 + $0x40] sm:$0xf]
    %v132 = vld [vmem:[%s3 + $0x44] sm:$0xf]
    %v133 = vld [vmem:[%s3 + $0x48] sm:$0xf]
    %v134 = vld [vmem:[%s3 + $0x4c] sm:$0xf]
    %v135 = vld [vmem:[%s3 + $0x50] sm:$0xf]
    %v136 = vld [vmem:[%s3 + $0x54] sm:$0xf]
    %v137 = vld [vmem:[%s3 + $0x58] sm:$0xf]
    %v138 = vld [vmem:[%s3 + $0x5c] sm:$0xf]
    %v139 = vld [vmem:[%s3 + $0x60] sm:$0xf]
    %v140 = vld [vmem:[%s3 + $0x64] sm:$0xf]
    %v141 = vld [vmem:[%s3 + $0x68] sm:$0xf]
    %v142 = vld [vmem:[%s3 + $0x6c] sm:$0xf]
    %v143 = vld [vmem:[%s3 + $0x70] sm:$0xf]
    %v144 = vld [vmem:[%s3 + $0x74] sm:$0xf]
    %v145 = vld [vmem:[%s3 + $0x78] sm:$0xf]
    %v146 = vld [vmem:[%s3 + $0x7c] sm:$0xf]
    %v147 = vld [vmem:[%s4] sm:$0x1]
    %v149 = vlaneseq
    %v150 = vshrl.u32 %v149, 7
    %v151 = vsub.s32 0, %v150
    %v152 = vrot.slane %v147, %v151
    %v186 = vunpack.c.l.b16 %v115
    %v187 = vunpack.c.l.b16 %v116
    %v188 = vunpack.c.l.b16 %v117
    %v189 = vunpack.c.l.b16 %v118
    %v190 = vunpack.c.l.b16 %v119
    %v191 = vunpack.c.l.b16 %v120
    %v192 = vunpack.c.l.b16 %v121
    %v193 = vunpack.c.l.b16 %v122
    %v194 = vunpack.c.l.b16 %v123
    %v195 = vunpack.c.l.b16 %v124
    %v196 = vunpack.c.l.b16 %v125
    %v197 = vunpack.c.l.b16 %v126
    %v198 = vunpack.c.l.b16 %v127
    %v199 = vunpack.c.l.b16 %v128
    %v200 = vunpack.c.l.b16 %v129
    %v201 = vunpack.c.l.b16 %v130
    %v202 = vunpack.c.l.b16 %v131
    %v203 = vunpack.c.l.b16 %v132
    %v204 = vunpack.c.l.b16 %v133
    %v205 = vunpack.c.l.b16 %v134
    %v206 = vunpack.c.l.b16 %v135
    %v207 = vunpack.c.l.b16 %v136
    %v208 = vunpack.c.l.b16 %v137
    %v209 = vunpack.c.l.b16 %v138
    %v210 = vunpack.c.l.b16 %v139
    %v211 = vunpack.c.l.b16 %v140
    %v212 = vunpack.c.l.b16 %v141
    %v213 = vunpack.c.l.b16 %v142
    %v214 = vunpack.c.l.b16 %v143
    %v215 = vunpack.c.l.b16 %v144
    %v216 = vunpack.c.l.b16 %v145
    %v217 = vunpack.c.l.b16 %v146
    %v218 = vpack.c.b16 %v187, %v186
    %v219 = vpack.c.b16 %v189, %v188
    %v220 = vpack.c.b16 %v191, %v190
    %v221 = vpack.c.b16 %v193, %v192
    %v222 = vpack.c.b16 %v195, %v194
    %v223 = vpack.c.b16 %v197, %v196
    %v224 = vpack.c.b16 %v199, %v198
    %v225 = vpack.c.b16 %v201, %v200
    %v226 = vpack.c.b16 %v203, %v202
    %v227 = vpack.c.b16 %v205, %v204
    %v228 = vpack.c.b16 %v207, %v206
    %v229 = vpack.c.b16 %v209, %v208
    %v230 = vpack.c.b16 %v211, %v210
    %v231 = vpack.c.b16 %v213, %v212
    %v232 = vpack.c.b16 %v215, %v214
    %v233 = vpack.c.b16 %v217, %v216
    %250 = vmatprep.subr.bf16.mxu0 0
    %251 = vmatpush1.bf16.msra.mxu0 %v218
    %252 = vmatprep.subr.bf16.mxu0 0
    %253 = vmatpush1.bf16.msra.mxu0 %v219
    %254 = vmatprep.subr.bf16.mxu0 0
    %255 = vmatpush1.bf16.msra.mxu0 %v220
    %256 = vmatprep.subr.bf16.mxu0 0
    %257 = vmatpush1.bf16.msra.mxu0 %v221
    %258 = vmatprep.subr.bf16.mxu0 0
    %259 = vmatpush1.bf16.msra.mxu0 %v222
    %260 = vmatprep.subr.bf16.mxu0 0
    %261 = vmatpush1.bf16.msra.mxu0 %v223
    %262 = vmatprep.subr.bf16.mxu0 0
    %263 = vmatpush1.bf16.msra.mxu0 %v224
    %264 = vmatprep.subr.bf16.mxu0 0
    %265 = vmatpush1.bf16.msra.mxu0 %v225
    %266 = vmatprep.subr.bf16.mxu0 0
    %267 = vmatpush1.bf16.msra.mxu0 %v226
    %268 = vmatprep.subr.bf16.mxu0 0
    %269 = vmatpush1.bf16.msra.mxu0 %v227
    %270 = vmatprep.subr.bf16.mxu0 0
    %271 = vmatpush1.bf16.msra.mxu0 %v228
    %272 = vmatprep.subr.bf16.mxu0 0
    %273 = vmatpush1.bf16.msra.mxu0 %v229
    %274 = vmatprep.subr.bf16.mxu0 0
    %275 = vmatpush1.bf16.msra.mxu0 %v230
    %276 = vmatprep.subr.bf16.mxu0 0
    %277 = vmatpush1.bf16.msra.mxu0 %v231
    %278 = vmatprep.subr.bf16.mxu0 0
    %279 = vmatpush1.bf16.msra.mxu0 %v232
    %280 = vmatprep.subr.bf16.mxu0 0
    %281 = vmatpush1.bf16.msra.mxu0 %v233
    %282 = vmatprep.mubr.bf16.mxu0 %v114
    %283 = vmatmul.mubr.bf16.gmra.mrb[0].mxu0 %v113
    %v284 = vpop.f32.mrb[0].mxu0
    %v285 = vadd.f32 %v152, %v284
    %v286 = vpop.f32.mrb[0].mxu0
    %v287 = vpop.f32.mrb[0].mxu0
    %v288 = vpop.f32.mrb[0].mxu0
    %289 = vdwg.mxu0
    %v290 = vmax.f32 %v285, 0.0
    %v291 = vpack.c.bf16 %v290, %v290
    %v292 = vld [vmem:[%s5] sm:$0xf]
    %v293 = vld [vmem:[%s5 + $0x4] sm:$0xf]
    %v294 = vld [vmem:[%s5 + $0x8] sm:$0xf]
    %v295 = vld [vmem:[%s5 + $0xc] sm:$0xf]
    %v296 = vld [vmem:[%s5 + $0x10] sm:$0xf]
    %v297 = vld [vmem:[%s5 + $0x14] sm:$0xf]
    %v298 = vld [vmem:[%s5 + $0x18] sm:$0xf]
    %v299 = vld [vmem:[%s5 + $0x1c] sm:$0xf]
    %v300 = vld [vmem:[%s5 + $0x20] sm:$0xf]
    %v301 = vld [vmem:[%s5 + $0x24] sm:$0xf]
    %v302 = vld [vmem:[%s5 + $0x28] sm:$0xf]
    %v303 = vld [vmem:[%s5 + $0x2c] sm:$0xf]
    %v304 = vld [vmem:[%s5 + $0x30] sm:$0xf]
    %v305 = vld [vmem:[%s5 + $0x34] sm:$0xf]
    %v306 = vld [vmem:[%s5 + $0x38] sm:$0xf]
    %v307 = vld [vmem:[%s5 + $0x3c] sm:$0xf]
    %v308 = vld [vmem:[%s6] sm:$0x1]
    %v310 = vlaneseq
    %v311 = vshrl.u32 %v310, 7
    %v312 = vsub.s32 0, %v311
    %v313 = vrot.slane %v308, %v312
    %v331 = vunpack.c.l.b16 %v292
    %v332 = vunpack.c.l.b16 %v293
    %v333 = vunpack.c.l.b16 %v294
    %v334 = vunpack.c.l.b16 %v295
    %v335 = vunpack.c.l.b16 %v296
    %v336 = vunpack.c.l.b16 %v297
    %v337 = vunpack.c.l.b16 %v298
    %v338 = vunpack.c.l.b16 %v299
    %v339 = vunpack.c.l.b16 %v300
    %v340 = vunpack.c.l.b16 %v301
    %v341 = vunpack.c.l.b16 %v302
    %v342 = vunpack.c.l.b16 %v303
    %v343 = vunpack.c.l.b16 %v304
    %v344 = vunpack.c.l.b16 %v305
    %v345 = vunpack.c.l.b16 %v306
    %v346 = vunpack.c.l.b16 %v307
    %v347 = vpack.c.b16 %v332, %v331
    %v348 = vpack.c.b16 %v334, %v333
    %v349 = vpack.c.b16 %v336, %v335
    %v350 = vpack.c.b16 %v338, %v337
    %v351 = vpack.c.b16 %v340, %v339
    %v352 = vpack.c.b16 %v342, %v341
    %v353 = vpack.c.b16 %v344, %v343
    %v354 = vpack.c.b16 %v346, %v345
    %363 = vmatprep.subr.bf16.mxu0 0
    %364 = vmatpush1.bf16.msra.mxu0 %v347
    %365 = vmatprep.subr.bf16.mxu0 0
    %366 = vmatpush1.bf16.msra.mxu0 %v348
    %367 = vmatprep.subr.bf16.mxu0 0
    %368 = vmatpush1.bf16.msra.mxu0 %v349
    %369 = vmatprep.subr.bf16.mxu0 0
    %370 = vmatpush1.bf16.msra.mxu0 %v350
    %371 = vmatprep.subr.bf16.mxu0 0
    %372 = vmatpush1.bf16.msra.mxu0 %v351
    %373 = vmatprep.subr.bf16.mxu0 0
    %374 = vmatpush1.bf16.msra.mxu0 %v352
    %375 = vmatprep.subr.bf16.mxu0 0
    %376 = vmatpush1.bf16.msra.mxu0 %v353
    %377 = vmatprep.subr.bf16.mxu0 0
    %378 = vmatpush1.bf16.msra.mxu0 %v354
    %379 = vmatprep.subr.bf16.mxu0 0
    %380 = vmatpush1.bf16.msra.mxu0 0
    %381 = vmatprep.subr.bf16.mxu0 0
    %382 = vmatpush1.bf16.msra.mxu0 0
    %383 = vmatprep.subr.bf16.mxu0 0
    %384 = vmatpush1.bf16.msra.mxu0 0
    %385 = vmatprep.subr.bf16.mxu0 0
    %386 = vmatpush1.bf16.msra.mxu0 0
    %387 = vmatprep.subr.bf16.mxu0 0
    %388 = vmatpush1.bf16.msra.mxu0 0
    %389 = vmatprep.subr.bf16.mxu0 0
    %390 = vmatpush1.bf16.msra.mxu0 0
    %391 = vmatprep.subr.bf16.mxu0 0
    %392 = vmatpush1.bf16.msra.mxu0 0
    %393 = vmatprep.subr.bf16.mxu0 0
    %394 = vmatpush1.bf16.msra.mxu0 0
    %395 = vmatprep.mubr.bf16.mxu0 0
    %396 = vmatmul.mubr.bf16.gmra.mrb[0].mxu0 %v291
    %v397 = vpop.f32.mrb[0].mxu0
    %v398 = vadd.f32 %v313, %v397
    %v399 = vpop.f32.mrb[0].mxu0
    %v400 = vpop.f32.mrb[0].mxu0
    %v401 = vpop.f32.mrb[0].mxu0
    %402 = vdwg.mxu0
    %v403 = vtanh.pop %v398
    %vm404 = vcmask 64512
    %405 = vst.msk [vmem:[#allocation2] sm:$0xff] %vm404, %v403
    // Predicated region
    $region30: #{actor_forward.1} parent=1 // pred_check
      _
    $region31: #{actor_forward.1} parent=1 // pred_check_branch
      %407 = sbr.rel (0) target = $region33
    $region32: #{actor_forward.1} parent=1 // pred_region
      %s409 = ssub.s32 128, 128
      %410 = vsyncadd [#allocation3], %s409
      %s412 = sshll.u32 [#allocation2], 4
      %s413 = int_to_ptr.vmem [resolvable:$true] %s412
      %415 = dma.vmem_to_hbm [thread:$0]  %s413, 128, %s7, [#allocation3]
    $region33: #{actor_forward.1} parent=1 // pred_fallthru
      _
    // Predicated region
    $region34: #{actor_forward.1} parent=1 // pred_check
      _
    $region35: #{actor_forward.1} parent=1 // pred_check_branch
      %417 = sbr.rel (0) target = $region37
    $region36: #{actor_forward.1} parent=1 // pred_region
      %418 = dma.done [#allocation3], 128
    $region37: #{actor_forward.1} parent=1 // pred_fallthru
      _
    %419 = vsyncpa [#allocation3], 1

</llo_original>
